<compile_context>
chip_gen: v5e
topology: v5e:2x2
jax: 0.10.0
libtpu: 0.0.40
codegen_flags: <defaults>
</compile_context>

<pallas_src>
import functools

import jax
import jax.numpy as jnp
from jax.experimental import pallas as pl
from jax.experimental.pallas import tpu as pltpu

_LANE = 128
_VMEM_SPEC = pl.BlockSpec(memory_space=pltpu.MemorySpace.VMEM)


def _round_up(x, m):
    return (x + m - 1) // m * m


def _fused_concat_linear_relu_kernel(ids_ref, mask_ref, w_ref, b_ref, o_ref, *, seq):
    # ids/mask: (B, S) int32 ; w: (2S, N_pad) f32 ; b: (1, N_pad) ; o: (B, N_pad)
    ids = ids_ref[...].astype(jnp.float32)
    msk = mask_ref[...].astype(jnp.float32)
    # concat(ids, mask) @ W  ==  ids @ W[:S] + mask @ W[S:]
    acc = jnp.dot(ids, w_ref[0:seq, :], preferred_element_type=jnp.float32)
    acc = acc + jnp.dot(msk, w_ref[seq:, :], preferred_element_type=jnp.float32)
    acc = acc + b_ref[...]
    o_ref[...] = jnp.maximum(acc, 0.0)


def _linear_relu_kernel(x_ref, w_ref, b_ref, o_ref):
    # x: (B, K) ; w: (K, N_pad) f32 ; b: (1, N_pad) ; o: (B, N_pad)
    x = x_ref[...].astype(jnp.float32)
    acc = jnp.dot(x, w_ref[...], preferred_element_type=jnp.float32) + b_ref[...]
    o_ref[...] = jnp.maximum(acc, 0.0)


def fused_forward(input_ids, attention_mask, w_pad, b_pad, *, seq, out_features):
    """relu(cat(ids, mask).float() @ W + b), concat/cast fused into the kernel."""
    batch = input_ids.shape[0]
    n_pad = w_pad.shape[1]
    kernel = functools.partial(_fused_concat_linear_relu_kernel, seq=seq)
    out = pl.pallas_call(
        kernel,
        out_shape=jax.ShapeDtypeStruct((batch, n_pad), jnp.float32),
        in_specs=[_VMEM_SPEC] * 4,
        out_specs=_VMEM_SPEC,
    )(input_ids, attention_mask, w_pad, b_pad)
    return out[:, :out_features]


def linear_relu_forward(x, w_pad, b_pad, *, out_features):
    """relu(x @ W + b) for an already-flattened float/integer input."""
    batch = x.shape[0]
    n_pad = w_pad.shape[1]
    out = pl.pallas_call(
        _linear_relu_kernel,
        out_shape=jax.ShapeDtypeStruct((batch, n_pad), jnp.float32),
        in_specs=[_VMEM_SPEC] * 3,
        out_specs=_VMEM_SPEC,
    )(x, w_pad, b_pad)
    return out[:, :out_features]


class TextProcessingModuleJAX:
    """JAX/Pallas port of the PyTorch TextProcessingModule."""

    def __init__(self, input_size, output_size, key):
        kw, kb = jax.random.split(key)
        # nn.Linear default init: U(-1/sqrt(in), 1/sqrt(in))
        bound = 1.0 / float(input_size) ** 0.5
        w = jax.random.uniform(kw, (input_size, output_size), jnp.float32, -bound, bound)
        b = jax.random.uniform(kb, (output_size,), jnp.float32, -bound, bound)

        self.input_size = int(input_size)
        self.output_size = int(output_size)
        self.n_pad = _round_up(self.output_size, _LANE)

        # Exact params (for reference / export).
        self.weight = w          # (K, N), already transposed for x @ W
        self.bias = b            # (N,)
        # Kernel-ready, lane-dense layouts precomputed ONCE (zero-padded cols).
        self.weight_pad = (
            jnp.zeros((self.input_size, self.n_pad), jnp.float32)
            .at[:, : self.output_size]
            .set(w)
        )
        self.bias_pad = (
            jnp.zeros((1, self.n_pad), jnp.float32)
            .at[:, : self.output_size]
            .set(b)
        )

    def __call__(self, input_ids, attention_mask=None):
        batch = input_ids.shape[0]
        if attention_mask is not None and input_ids.ndim == 2:
            # Fast path: concat + cast fused into the Pallas kernel.
            seq = input_ids.shape[1]
            assert 2 * seq == self.input_size, "flattened feature size mismatch"
            return fused_forward(
                input_ids,
                attention_mask,
                self.weight_pad,
                self.bias_pad,
                seq=seq,
                out_features=self.output_size,
            )
        # General / no-mask path: flatten in JAX, single-dot kernel (cast fused).
        if attention_mask is not None:
            combined = jnp.concatenate((input_ids, attention_mask), axis=-1)
        else:
            combined = input_ids
        x = combined.reshape(batch, -1)
        assert x.shape[1] == self.input_size, "flattened feature size mismatch"
        return linear_relu_forward(
            x, self.weight_pad, self.bias_pad, out_features=self.output_size
        )


if __name__ == "__main__":
    # Small shapes consistent with the module's forward:
    # batch=2, seq=8 token ids + matching attention mask -> 16 flattened features.
    batch, seq = 2, 8
    input_size = 2 * seq
    output_size = 32

    key = jax.random.PRNGKey(0)
    k_ids, k_mask, k_full, k_params = jax.random.split(key, 4)

    input_ids = jax.random.randint(k_ids, (batch, seq), 0, 1000, dtype=jnp.int32)
    attention_mask = jax.random.randint(k_mask, (batch, seq), 0, 2, dtype=jnp.int32)

    module = TextProcessingModuleJAX(input_size, output_size, k_params)

    # Path 1: with attention mask (fused concat+cast kernel).
    out = module(input_ids, attention_mask)
    jax.block_until_ready(out)
    combined = jnp.concatenate((input_ids, attention_mask), axis=-1).astype(jnp.float32)
    ref = jnp.maximum(combined.reshape(batch, -1) @ module.weight + module.bias, 0.0)
    assert out.shape == (batch, output_size)
    assert jnp.allclose(out, ref, atol=1e-5, rtol=1e-5)

    # Path 2: no attention mask (input already carries all features).
    ids_full = jax.random.randint(k_full, (batch, input_size), 0, 1000, dtype=jnp.int32)
    out2 = module(ids_full)
    jax.block_until_ready(out2)
    ref2 = jnp.maximum(
        ids_full.astype(jnp.float32) @ module.weight + module.bias, 0.0
    )
    assert out2.shape == (batch, output_size)
    assert jnp.allclose(out2, ref2, atol=1e-5, rtol=1e-5)

    print("KERNEL_OK")
</pallas_src>

<mosaic_0001>
module attributes {stable_mosaic.version = 11 : i64} {
  func.func @_fused_concat_linear_relu_kernel(%arg0: memref<2x8xi32, #tpu.memory_space<vmem>>, %arg1: memref<2x8xi32, #tpu.memory_space<vmem>>, %arg2: memref<16x128xf32, #tpu.memory_space<vmem>>, %arg3: memref<1x128xf32, #tpu.memory_space<vmem>>, %arg4: memref<2x128xf32, #tpu.memory_space<vmem>>) attributes {dimension_semantics = [], scalar_prefetch = 0 : i64, scratch_operands = 0 : i64, tpu.core_type = #tpu.core_type<tc>} {
    %c0 = arith.constant 0 : index
    %c0_0 = arith.constant 0 : index
    %0 = vector.load %arg0[%c0, %c0_0] : memref<2x8xi32, #tpu.memory_space<vmem>>, vector<2x8xi32>
    %1 = arith.sitofp %0 : vector<2x8xi32> to vector<2x8xf32>
    %c0_1 = arith.constant 0 : index
    %c0_2 = arith.constant 0 : index
    %2 = vector.load %arg1[%c0_1, %c0_2] : memref<2x8xi32, #tpu.memory_space<vmem>>, vector<2x8xi32>
    %3 = arith.sitofp %2 : vector<2x8xi32> to vector<2x8xf32>
    %c0_3 = arith.constant 0 : index
    %c0_4 = arith.constant 0 : index
    %4 = vector.load %arg2[%c0_3, %c0_4] : memref<16x128xf32, #tpu.memory_space<vmem>>, vector<8x128xf32>
    %cst = arith.constant dense<0.000000e+00> : vector<2x128xf32>
    %5 = tpu.matmul %1, %4, %cst {dimension_numbers = #tpu.dot_dimension_numbers<[1], [0], [0], [1], [0, 0, 1, 1], [], []>} : vector<2x8xf32>, vector<8x128xf32>, vector<2x128xf32> -> vector<2x128xf32>
    %c8 = arith.constant 8 : index
    %c0_5 = arith.constant 0 : index
    %6 = vector.load %arg2[%c8, %c0_5] : memref<16x128xf32, #tpu.memory_space<vmem>>, vector<8x128xf32>
    %cst_6 = arith.constant dense<0.000000e+00> : vector<2x128xf32>
    %7 = tpu.matmul %3, %6, %cst_6 {dimension_numbers = #tpu.dot_dimension_numbers<[1], [0], [0], [1], [0, 0, 1, 1], [], []>} : vector<2x8xf32>, vector<8x128xf32>, vector<2x128xf32> -> vector<2x128xf32>
    %8 = arith.addf %5, %7 : vector<2x128xf32>
    %c0_7 = arith.constant 0 : index
    %c0_8 = arith.constant 0 : index
    %9 = vector.load %arg3[%c0_7, %c0_8] : memref<1x128xf32, #tpu.memory_space<vmem>>, vector<1x128xf32>
    %10 = vector.broadcast %9 : vector<1x128xf32> to vector<2x128xf32>
    %11 = arith.addf %8, %10 : vector<2x128xf32>
    %cst_9 = arith.constant 0.000000e+00 : f32
    %12 = vector.broadcast %cst_9 : f32 to vector<2x128xf32>
    %13 = arith.maximumf %11, %12 : vector<2x128xf32>
    %c0_10 = arith.constant 0 : index
    %c0_11 = arith.constant 0 : index
    %14 = vector.load %arg4[%c0_10, %c0_11] : memref<2x128xf32, #tpu.memory_space<vmem>>, vector<2x128xf32>
    tpu.vector_store %arg4[%c0_10, %c0_11], %13 {strides = array<i32>} : memref<2x128xf32, #tpu.memory_space<vmem>>, vector<2x128xf32>,
    return
  }
}

</mosaic_0001>

<llo_original>
// kernel: tpu_custom_call.1
$region0: #{tpu_custom_call.1}
  #allocation0 [shape = 'u32[]', space=smem, size = 0x4, offset = 0x4, fixed_abs, tag = 'smem constant byte address 0x4 - core index']
  #allocation1 [shape = 'u32[72,128]{1,0:T(1,128)}', space=vmem, size = 0x9000, scoped, tag = 'internal scratch']
  %s0 = inlined_call_operand.hbm [shape: s32[2,8], index: 0, kind: input, shape index: {}]
  %s1 = inlined_call_operand.hbm [shape: s32[2,8], index: 1, kind: input, shape index: {}]
  %s2 = inlined_call_operand.hbm [shape: f32[16,128], index: 2, kind: input, shape index: {}]
  %s3 = inlined_call_operand.vmem [shape: f32[1,128], index: 3, kind: input, shape index: {}]
  %s4 = inlined_call_operand.hbm [shape: f32[2,128], index: 4, kind: output, shape index: {}]
  %s5 = sld [smem:[#allocation0]]
  $region38: #{tpu_custom_call.1} parent=0
    _
  %s7 = ssub.s32 1, %s5
  %s8 = scalar_select 0, %s7, %s5
  $region1: #{tpu_custom_call.1} parent=0
    #allocation2 [shape = 'u8[1024]{0}', space=vmem, size = 0x400, scoped, tag = 'input window, operand 0, single buffered']
    #allocation3 [shape = 's32[1]{0}', space=sflag, size = 0x4, scoped, tag = 'scoped memory for tpu_custom_call.1']
    #allocation4 [shape = 's32[1]{0}', space=sflag, size = 0x4, scoped, tag = 'scoped memory for tpu_custom_call.1']
    #allocation5 [shape = 'u8[1024]{0}', space=vmem, size = 0x400, scoped, tag = 'input window, operand 1, single buffered']
    #allocation6 [shape = 's32[1]{0}', space=sflag, size = 0x4, scoped, tag = 'scoped memory for tpu_custom_call.1']
    #allocation7 [shape = 'u8[8192]{0}', space=vmem, size = 0x2000, scoped, tag = 'input window, operand 2, single buffered']
    #allocation8 [shape = 'u8[1024]{0}', space=vmem, size = 0x400, scoped, tag = 'output window, operand 0, single buffered']
    %9 = vsyncpa [#allocation3], 0
    %10 = vsyncpa [#allocation6], 0
    %11 = vsyncpa [#allocation4], 0
    // Predicated region
    $region2: #{tpu_custom_call.1} parent=1 // pred_check
      _
    $region3: #{tpu_custom_call.1} parent=1 // pred_check_branch
      %13 = sbr.rel (0) target = $region5
    $region4: #{tpu_custom_call.1} parent=1 // pred_region
      %15 = vsyncadd [#allocation3], 0
      %s17 = sshll.u32 %s0, 4
      %s18 = int_to_ptr.hbm [resolvable:$true] %s17
      %s19 = sshll.u32 [#allocation2], 4
      %s20 = int_to_ptr.vmem [resolvable:$true] %s19
      %22 = dma.hbm_to_vmem [thread:$0]  %s18, 32, %s20, [#allocation3]
    $region5: #{tpu_custom_call.1} parent=1 // pred_fallthru
      _
    // Predicated region
    $region6: #{tpu_custom_call.1} parent=1 // pred_check
      _
    $region7: #{tpu_custom_call.1} parent=1 // pred_check_branch
      %24 = sbr.rel (0) target = $region9
    $region8: #{tpu_custom_call.1} parent=1 // pred_region
      %26 = vsyncadd [#allocation6], 0
      %s28 = sshll.u32 %s1, 4
      %s29 = int_to_ptr.hbm [resolvable:$true] %s28
      %s30 = sshll.u32 [#allocation5], 4
      %s31 = int_to_ptr.vmem [resolvable:$true] %s30
      %33 = dma.hbm_to_vmem [thread:$0]  %s29, 32, %s31, [#allocation6]
    $region9: #{tpu_custom_call.1} parent=1 // pred_fallthru
      _
    // Predicated region
    $region10: #{tpu_custom_call.1} parent=1 // pred_check
      _
    $region11: #{tpu_custom_call.1} parent=1 // pred_check_branch
      %35 = sbr.rel (0) target = $region13
    $region12: #{tpu_custom_call.1} parent=1 // pred_region
      %37 = vsyncadd [#allocation6], 0
      %s38 = sshll.u32 %s2, 4
      %s39 = int_to_ptr.hbm [resolvable:$true] %s38
      %s40 = sshll.u32 [#allocation7], 4
      %s41 = int_to_ptr.vmem [resolvable:$true] %s40
      %46 = dma.hbm_to_vmem [thread:$0]  %s39, 256, %s41, [#allocation6], 128, 128, 8
    $region13: #{tpu_custom_call.1} parent=1 // pred_fallthru
      _
    // Predicated region
    $region14: #{tpu_custom_call.1} parent=1 // pred_check
      _
    $region15: #{tpu_custom_call.1} parent=1 // pred_check_branch
      %48 = sbr.rel (0) target = $region17
    $region16: #{tpu_custom_call.1} parent=1 // pred_region
      _
    $region17: #{tpu_custom_call.1} parent=1 // pred_fallthru
      _
    // Predicated region
    $region18: #{tpu_custom_call.1} parent=1 // pred_check
      _
    $region19: #{tpu_custom_call.1} parent=1 // pred_check_branch
      %50 = sbr.rel (0) target = $region21
    $region20: #{tpu_custom_call.1} parent=1 // pred_region
      %52 = dma.done [#allocation3], 32
    $region21: #{tpu_custom_call.1} parent=1 // pred_fallthru
      _
    // Predicated region
    $region22: #{tpu_custom_call.1} parent=1 // pred_check
      _
    $region23: #{tpu_custom_call.1} parent=1 // pred_check_branch
      %54 = sbr.rel (0) target = $region25
    $region24: #{tpu_custom_call.1} parent=1 // pred_region
      %56 = dma.done [#allocation6], 32
    $region25: #{tpu_custom_call.1} parent=1 // pred_fallthru
      _
    // Predicated region
    $region26: #{tpu_custom_call.1} parent=1 // pred_check
      _
    $region27: #{tpu_custom_call.1} parent=1 // pred_check_branch
      %58 = sbr.rel (0) target = $region29
    $region28: #{tpu_custom_call.1} parent=1 // pred_region
      %60 = dma.done [#allocation6], 256
    $region29: #{tpu_custom_call.1} parent=1 // pred_fallthru
      _
    %v61 = vld [vmem:[#allocation2] sm:$0x3]
    %v62 = vcvt.s32.f32 %v61
    %v63 = vld [vmem:[#allocation5] sm:$0x3]
    %v64 = vcvt.s32.f32 %v63
    %v65 = vld [vmem:[#allocation7] sm:$0xff]
    %v66 = vld [vmem:[#allocation7 + $0x8] sm:$0xff]
    %vm67 = vcmask 64512
    %v69 = vsel %vm67, %v64, 0
    %71 = vmatpush.msra.mxu0 0.0
    %72 = vmatpush.msra.mxu0 0.0
    %73 = vmatpush.msra.mxu0 0.0
    %74 = vmatpush.msra.mxu0 0.0
    %75 = vmatpush.msra.mxu0 0.0
    %76 = vmatpush.msra.mxu0 0.0
    %77 = vmatpush.msra.mxu0 0.0
    %78 = vmatpush.msra.mxu0 0.0
    %79 = vmatpush.msra.mxu0 0.0
    %80 = vmatpush.msra.mxu0 0.0
    %81 = vmatpush.msra.mxu0 0.0
    %82 = vmatpush.msra.mxu0 0.0
    %83 = vmatpush.msra.mxu0 0.0
    %84 = vmatpush.msra.mxu0 0.0
    %85 = vmatpush.msra.mxu0 0.0
    %86 = vmatpush.msra.mxu0 %v66
    %87 = vmatmul.f32.gmra.mxu0 %v69
    %v88 = vpop.f32.mrf.mxu0
    %v89 = vadd.f32 0.0, %v88
    %90 = vdwg.mxu0
    %v92 = vsel %vm67, %v62, 0
    %94 = vmatpush.msra.mxu0 0.0
    %95 = vmatpush.msra.mxu0 0.0
    %96 = vmatpush.msra.mxu0 0.0
    %97 = vmatpush.msra.mxu0 0.0
    %98 = vmatpush.msra.mxu0 0.0
    %99 = vmatpush.msra.mxu0 0.0
    %100 = vmatpush.msra.mxu0 0.0
    %101 = vmatpush.msra.mxu0 0.0
    %102 = vmatpush.msra.mxu0 0.0
    %103 = vmatpush.msra.mxu0 0.0
    %104 = vmatpush.msra.mxu0 0.0
    %105 = vmatpush.msra.mxu0 0.0
    %106 = vmatpush.msra.mxu0 0.0
    %107 = vmatpush.msra.mxu0 0.0
    %108 = vmatpush.msra.mxu0 0.0
    %109 = vmatpush.msra.mxu0 %v65
    %110 = vmatmul.f32.gmra.mxu0 %v92
    %v111 = vpop.f32.mrf.mxu0
    %v112 = vadd.f32 %v89, %v111
    %113 = vdwg.mxu0
    %v114 = vld [vmem:[%s3] sm:$0x1]
    %v116 = vperm.slane %v114, 0
    %v118 = vadd.f32 %v112, %v116
    %v119 = vmax.f32 %v118, 0.0
    %120 = vst [vmem:[#allocation8] sm:$0x3] %v119
    // Predicated region
    $region30: #{tpu_custom_call.1} parent=1 // pred_check
      _
    $region31: #{tpu_custom_call.1} parent=1 // pred_check_branch
      %122 = sbr.rel (0) target = $region33
    $region32: #{tpu_custom_call.1} parent=1 // pred_region
      %124 = vsyncadd [#allocation4], 0
      %s126 = sshll.u32 [#allocation8], 4
      %s127 = int_to_ptr.vmem [resolvable:$true] %s126
      %s128 = sshll.u32 %s4, 4
      %s129 = int_to_ptr.hbm [resolvable:$true] %s128
      %131 = dma.vmem_to_hbm [thread:$0]  %s127, 32, %s129, [#allocation4]
    $region33: #{tpu_custom_call.1} parent=1 // pred_fallthru
      _
    // Predicated region
    $region34: #{tpu_custom_call.1} parent=1 // pred_check
      _
    $region35: #{tpu_custom_call.1} parent=1 // pred_check_branch
      %133 = sbr.rel (0) target = $region37
    $region36: #{tpu_custom_call.1} parent=1 // pred_region
      %135 = dma.done [#allocation4], 32
    $region37: #{tpu_custom_call.1} parent=1 // pred_fallthru
      _
    %136 = vsyncpa [#allocation3], 1
    %137 = vsyncpa [#allocation6], 1
    %138 = vsyncpa [#allocation4], 1

</llo_original>
